<compile_context>
chip_gen: v7x
topology: tpu7x:2x2x1
jax: 0.10.0
libtpu: 0.0.40
codegen_flags: <defaults>
</compile_context>

<pallas_src>
import functools

import numpy as np
import jax
import jax.numpy as jnp
from jax.experimental import pallas as pl
from jax.experimental.pallas import tpu as pltpu


# ----------------------------- Pallas kernel ---------------------------------


def _fused_msgcn_kernel(x_ref, b_ref, scale_ref, shift_ref, o_ref, acc_ref, *,
                        activation):
    # x_ref:     (tm, tk) bf16  rows = (n, t), cols = (c, u)
    # b_ref:     (tk, tn) bf16  rows = (c, u), cols = (o, v)   fused W x (A_powers + A_res)
    # scale_ref: (1, tn)  f32   folded BN scale (lane vector, broadcast over rows)
    # shift_ref: (1, tn)  f32   folded BN shift
    # o_ref:     (tm, tn) f32   lane-dense output tile
    # acc_ref:   (tm, tn) f32   accumulator, resident across the K grid axis
    @pl.when(pl.program_id(2) == 0)
    def _init():
        acc_ref[...] = jnp.zeros_like(acc_ref)

    acc_ref[...] += jnp.dot(x_ref[...], b_ref[...],
                            preferred_element_type=jnp.float32)

    @pl.when(pl.program_id(2) == pl.num_programs(2) - 1)
    def _epilogue():
        y = acc_ref[...] * scale_ref[...] + shift_ref[...]
        if activation == 'relu':
            y = jnp.maximum(y, 0.0)
        elif activation == 'leakyrelu':
            y = jnp.where(y >= 0.0, y, 0.2 * y)
        elif activation == 'tanh':
            y = jnp.tanh(y)
        elif activation in ('linear', None):
            pass
        else:
            raise ValueError('Not supported activation: %s' % activation)
        o_ref[...] = y.astype(o_ref.dtype)


# ------------------------------- wrapper --------------------------------------


def _pick_tile(dim, cap, quantum):
    """Block size for one GEMM dim and the (possibly padded) array extent."""
    if dim <= cap:
        return dim, dim                       # full-extent block is always legal
    cap = max(quantum, (cap // quantum) * quantum)
    return cap, pl.cdiv(dim, cap) * cap


def _pad2d(a, rows, cols):
    pr, pc = rows - a.shape[0], cols - a.shape[1]
    if pr or pc:
        a = jnp.pad(a, ((0, pr), (0, pc)))
    return a


def ms_gcn_forward(x, A_powers, A_res, conv_weight, gamma, beta,
                   running_mean, running_var, *, num_scales, eps=1e-5,
                   activation='relu', compute_dtype=jnp.bfloat16,
                   bm=256, bn=256, bk=128):
    """MS_GCN forward (inference). x: (N, C, T, V) f32 -> (N, C_out, T, V) f32."""
    N, C, T, V = x.shape
    S = num_scales
    C_out = conv_weight.shape[0]
    assert A_powers.shape == (S * V, V), A_powers.shape
    assert conv_weight.shape == (C_out, S * C), conv_weight.shape

    # ---- parameter-only preprocessing (glue; analogous to folding BN) ----
    A_eff = (A_powers + A_res).astype(jnp.float32).reshape(S, V, V)     # [s, v, u]
    W3 = conv_weight.astype(jnp.float32).reshape(C_out, S, C)           # [o, s, c]
    # Fused weight: B[(c,u), (o,v)] = sum_s W[o,s,c] * A_eff[s,v,u]
    B = jnp.einsum('osc,svu->cuov', W3, A_eff).reshape(C * V, C_out * V)
    B = B.astype(compute_dtype)

    scale = (gamma / jnp.sqrt(running_var + eps)).astype(jnp.float32)   # (C_out,)
    shift = (beta - running_mean * scale).astype(jnp.float32)
    # per GEMM column (o, v): replicate each channel's scale/shift V times (lane vector)
    scale_col = jnp.repeat(scale, V).reshape(1, C_out * V)
    shift_col = jnp.repeat(shift, V).reshape(1, C_out * V)

    # ---- layout plumbing (wrapper side): channels-last GEMM operands ----
    # X[(n,t), (c,u)] = x[n, c, t, u]
    X2 = x.transpose(0, 2, 1, 3).reshape(N * T, C * V).astype(compute_dtype)

    M, K, Nc = N * T, C * V, C_out * V
    tm, M_p = _pick_tile(M, bm, 8)
    tn, N_p = _pick_tile(Nc, bn, 128)
    tk, K_p = _pick_tile(K, bk, 128)

    X2 = _pad2d(X2, M_p, K_p)           # zero padding (padded K contributes 0)
    B = _pad2d(B, K_p, N_p)
    scale_col = _pad2d(scale_col, 1, N_p)
    shift_col = _pad2d(shift_col, 1, N_p)

    grid = (M_p // tm, N_p // tn, K_p // tk)
    kernel = functools.partial(_fused_msgcn_kernel, activation=activation)

    out2 = pl.pallas_call(
        kernel,
        out_shape=jax.ShapeDtypeStruct((M_p, N_p), x.dtype),
        grid=grid,
        in_specs=[
            pl.BlockSpec((tm, tk), lambda i, j, k: (i, k)),   # X tile
            pl.BlockSpec((tk, tn), lambda i, j, k: (k, j)),   # fused weight tile
            pl.BlockSpec((1, tn), lambda i, j, k: (0, j)),    # BN scale lane vector
            pl.BlockSpec((1, tn), lambda i, j, k: (0, j)),    # BN shift lane vector
        ],
        out_specs=pl.BlockSpec((tm, tn), lambda i, j, k: (i, j)),
        scratch_shapes=[pltpu.VMEM((tm, tn), jnp.float32)],
        compiler_params=pltpu.CompilerParams(
            dimension_semantics=("parallel", "parallel", "arbitrary")),
    )(X2, B, scale_col, shift_col)

    # out2[(n,t), (o,v)] -> (N, C_out, T, V)  (NCHW, matching PyTorch)
    out = out2[:M, :Nc].reshape(N, T, C_out, V).transpose(0, 2, 1, 3)
    return out


# ------------------------ reference + graph construction ----------------------


def _k_adjacency(A, k, with_self=False, self_factor=1):
    I = np.eye(len(A), dtype=A.dtype)
    if k == 0:
        return I
    Ak = (np.minimum(np.linalg.matrix_power(A + I, k), 1)
          - np.minimum(np.linalg.matrix_power(A + I, k - 1), 1))
    if with_self:
        Ak = Ak + self_factor * I
    return Ak


def _normalize_adjacency_matrix(A):
    node_degrees = A.sum(-1)
    degs_inv_sqrt = np.power(node_degrees, -0.5)
    norm_degs_matrix = np.eye(len(node_degrees)) * degs_inv_sqrt
    return (norm_degs_matrix @ A @ norm_degs_matrix).astype(np.float32)


def _reference(x, A_powers, A_res, conv_weight, gamma, beta,
               running_mean, running_var, *, num_scales, eps=1e-5):
    # Pure-JAX reference matching the PyTorch MS_GCN forward (eval mode, ReLU).
    N, C, T, V = x.shape
    A = A_powers + A_res
    support = jnp.einsum('vu,nctu->nctv', A, x)                      # (N, C, T, S*V)
    support = support.reshape(N, C, T, num_scales, V)
    support = support.transpose(0, 3, 1, 2, 4).reshape(N, num_scales * C, T, V)
    out = jnp.einsum('oj,njtv->notv', conv_weight, support)          # 1x1 conv, no bias
    scale = gamma / jnp.sqrt(running_var + eps)
    shift = beta - running_mean * scale
    out = out * scale[None, :, None, None] + shift[None, :, None, None]
    return jnp.maximum(out, 0.0)


# ----------------------------------- main --------------------------------------


if __name__ == "__main__":
    key = jax.random.PRNGKey(0)
    k1, k2, k3, k4, k5, k6, k7 = jax.random.split(key, 7)

    # Small shapes consistent with MS_GCN: x is (N, C_in, T, V)
    N, C_in, T, V = 2, 16, 16, 16
    num_scales, C_out = 4, 32

    # Deterministic skeleton graph: ring over V joints (binary, no self loops).
    A_binary = np.zeros((V, V), dtype=np.float32)
    for i in range(V):
        A_binary[i, (i + 1) % V] = 1.0
        A_binary[i, (i - 1) % V] = 1.0
    A_powers_np = np.concatenate([
        _normalize_adjacency_matrix(_k_adjacency(A_binary, k, with_self=True))
        for k in range(num_scales)])                                  # (S*V, V)
    A_powers = jnp.asarray(A_powers_np, dtype=jnp.float32)

    x = jax.random.normal(k1, (N, C_in, T, V), dtype=jnp.float32)
    A_res = jax.random.uniform(k2, (num_scales * V, V), jnp.float32, -1e-6, 1e-6)
    conv_weight = jax.random.normal(
        k3, (C_out, num_scales * C_in), dtype=jnp.float32) * 0.1      # Conv2d 1x1, no bias
    gamma = 1.0 + 0.1 * jax.random.normal(k4, (C_out,), dtype=jnp.float32)
    beta = 0.1 * jax.random.normal(k5, (C_out,), dtype=jnp.float32)
    running_mean = 0.1 * jax.random.normal(k6, (C_out,), dtype=jnp.float32)
    running_var = 1.0 + 0.1 * jnp.abs(jax.random.normal(k7, (C_out,), dtype=jnp.float32))

    out = ms_gcn_forward(
        x, A_powers, A_res, conv_weight, gamma, beta, running_mean, running_var,
        num_scales=num_scales)
    out = jax.block_until_ready(out)

    ref = _reference(
        x, A_powers, A_res, conv_weight, gamma, beta, running_mean, running_var,
        num_scales=num_scales)

    assert out.shape == ref.shape, (out.shape, ref.shape)
    max_err = float(jnp.max(jnp.abs(out - ref)))
    # bf16 MXU operands with f32 accumulation -> loose tolerance vs the f32 reference.
    assert jnp.allclose(out, ref, atol=5e-2, rtol=5e-2), max_err

    print("KERNEL_OK")
</pallas_src>

<mosaic_0001>
module attributes {stable_mosaic.version = 11 : i64} {
  func.func @_fused_msgcn_kernel(%arg0: i32, %arg1: i32, %arg2: i32, %arg3: memref<32x128xbf16, #tpu.memory_space<vmem>>, %arg4: memref<128x256xbf16, #tpu.memory_space<vmem>>, %arg5: memref<1x256xf32, #tpu.memory_space<vmem>>, %arg6: memref<1x256xf32, #tpu.memory_space<vmem>>, %arg7: memref<32x256xf32, #tpu.memory_space<vmem>>, %arg8: memref<32x256xf32, #tpu.memory_space<vmem>>) attributes {dimension_semantics = [#tpu.dimension_semantics<parallel>, #tpu.dimension_semantics<parallel>, #tpu.dimension_semantics<arbitrary>], iteration_bounds = array<i64: 1, 2, 2>, scalar_prefetch = 0 : i64, scratch_operands = 1 : i64, tpu.core_type = #tpu.core_type<tc>, window_params = [{transform_indices = @transform_0, window_bounds = array<i64: 32, 128>}, {transform_indices = @transform_1, window_bounds = array<i64: 128, 256>}, {transform_indices = @transform_2, window_bounds = array<i64: 1, 256>}, {transform_indices = @transform_3, window_bounds = array<i64: 1, 256>}, {transform_indices = @transform_4, window_bounds = array<i64: 32, 256>}]} {
    %c0_i32 = arith.constant 0 : i32
    %0 = arith.cmpi eq, %arg2, %c0_i32 : i32
    %1 = arith.extui %0 : i1 to i32
    %c0_i32_0 = arith.constant 0 : i32
    %2 = arith.cmpi ne, %1, %c0_i32_0 : i32
    scf.if %2 {
      %cst_9 = arith.constant 0.000000e+00 : f32
      %12 = vector.broadcast %cst_9 : f32 to vector<32x256xf32>
      %c0_10 = arith.constant 0 : index
      %c0_11 = arith.constant 0 : index
      %13 = vector.load %arg8[%c0_10, %c0_11] : memref<32x256xf32, #tpu.memory_space<vmem>>, vector<32x256xf32>
      tpu.vector_store %arg8[%c0_10, %c0_11], %12 {strides = array<i32>} : memref<32x256xf32, #tpu.memory_space<vmem>>, vector<32x256xf32>,
    } else {
    }
    %c0 = arith.constant 0 : index
    %c0_1 = arith.constant 0 : index
    %3 = vector.load %arg8[%c0, %c0_1] : memref<32x256xf32, #tpu.memory_space<vmem>>, vector<32x256xf32>
    %c0_2 = arith.constant 0 : index
    %c0_3 = arith.constant 0 : index
    %4 = vector.load %arg3[%c0_2, %c0_3] : memref<32x128xbf16, #tpu.memory_space<vmem>>, vector<32x128xbf16>
    %c0_4 = arith.constant 0 : index
    %c0_5 = arith.constant 0 : index
    %5 = vector.load %arg4[%c0_4, %c0_5] : memref<128x256xbf16, #tpu.memory_space<vmem>>, vector<128x256xbf16>
    %cst = arith.constant dense<0.000000e+00> : vector<32x256xf32>
    %6 = tpu.matmul %4, %5, %cst {dimension_numbers = #tpu.dot_dimension_numbers<[1], [0], [0], [1], [0, 0, 1, 1], [], []>} : vector<32x128xbf16>, vector<128x256xbf16>, vector<32x256xf32> -> vector<32x256xf32>
    %7 = arith.addf %3, %6 : vector<32x256xf32>
    %c0_6 = arith.constant 0 : index
    %c0_7 = arith.constant 0 : index
    %8 = vector.load %arg8[%c0_6, %c0_7] : memref<32x256xf32, #tpu.memory_space<vmem>>, vector<32x256xf32>
    tpu.vector_store %arg8[%c0_6, %c0_7], %7 {strides = array<i32>} : memref<32x256xf32, #tpu.memory_space<vmem>>, vector<32x256xf32>,
    %c1_i32 = arith.constant 1 : i32
    %9 = arith.cmpi eq, %arg2, %c1_i32 : i32
    %10 = arith.extui %9 : i1 to i32
    %c0_i32_8 = arith.constant 0 : i32
    %11 = arith.cmpi ne, %10, %c0_i32_8 : i32
    scf.if %11 {
      %c0_9 = arith.constant 0 : index
      %c0_10 = arith.constant 0 : index
      %12 = vector.load %arg8[%c0_9, %c0_10] : memref<32x256xf32, #tpu.memory_space<vmem>>, vector<32x256xf32>
      %c0_11 = arith.constant 0 : index
      %c0_12 = arith.constant 0 : index
      %13 = vector.load %arg5[%c0_11, %c0_12] : memref<1x256xf32, #tpu.memory_space<vmem>>, vector<1x256xf32>
      %14 = vector.broadcast %13 : vector<1x256xf32> to vector<32x256xf32>
      %15 = arith.mulf %12, %14 : vector<32x256xf32>
      %c0_13 = arith.constant 0 : index
      %c0_14 = arith.constant 0 : index
      %16 = vector.load %arg6[%c0_13, %c0_14] : memref<1x256xf32, #tpu.memory_space<vmem>>, vector<1x256xf32>
      %17 = vector.broadcast %16 : vector<1x256xf32> to vector<32x256xf32>
      %18 = arith.addf %15, %17 : vector<32x256xf32>
      %cst_15 = arith.constant 0.000000e+00 : f32
      %19 = vector.broadcast %cst_15 : f32 to vector<32x256xf32>
      %20 = arith.maximumf %18, %19 : vector<32x256xf32>
      %c0_16 = arith.constant 0 : index
      %c0_17 = arith.constant 0 : index
      %21 = vector.load %arg7[%c0_16, %c0_17] : memref<32x256xf32, #tpu.memory_space<vmem>>, vector<32x256xf32>
      tpu.vector_store %arg7[%c0_16, %c0_17], %20 {strides = array<i32>} : memref<32x256xf32, #tpu.memory_space<vmem>>, vector<32x256xf32>,
    } else {
    }
    return
  }
  func.func @transform_0(%arg0: i32, %arg1: i32, %arg2: i32) -> (i32, i32) {
    %c0_i32 = arith.constant 0 : i32
    return %arg0, %arg2 : i32, i32
  }
  func.func @transform_1(%arg0: i32, %arg1: i32, %arg2: i32) -> (i32, i32) {
    %c0_i32 = arith.constant 0 : i32
    return %arg2, %arg1 : i32, i32
  }
  func.func @transform_2(%arg0: i32, %arg1: i32, %arg2: i32) -> (i32, i32) {
    %c0_i32 = arith.constant 0 : i32
    %c0_i32_0 = arith.constant 0 : i32
    return %c0_i32, %arg1 : i32, i32
  }
  func.func @transform_3(%arg0: i32, %arg1: i32, %arg2: i32) -> (i32, i32) {
    %c0_i32 = arith.constant 0 : i32
    %c0_i32_0 = arith.constant 0 : i32
    return %c0_i32, %arg1 : i32, i32
  }
  func.func @transform_4(%arg0: i32, %arg1: i32, %arg2: i32) -> (i32, i32) {
    %c0_i32 = arith.constant 0 : i32
    return %arg0, %arg1 : i32, i32
  }
}

</mosaic_0001>

<llo_original>
// kernel: tpu_custom_call.1
$region0: #{tpu_custom_call.1}
  #allocation0 [shape = 'u32[]', space=smem, size = 0x4, offset = 0x4, fixed_abs, tag = 'smem constant byte address 0x4 - core index']
  #allocation1 [shape = 'u32[144,128]{1,0:T(1,128)}', space=vmem, size = 0x12000, scoped, tag = 'internal scratch']
  #allocation2 [shape = 'f32[32,256]{1,0:T(8,128)}', space=vmem, size = 0x8000, scoped, tag = 'scratch operand']
  %s0 = inlined_call_operand.hbm [shape: bf16[32,256], index: 0, kind: input, shape index: {}]
  %s1 = inlined_call_operand.hbm [shape: bf16[256,512], index: 1, kind: input, shape index: {}]
  %s2 = inlined_call_operand.vmem [shape: f32[1,512], index: 2, kind: input, shape index: {}]
  %s3 = inlined_call_operand.vmem [shape: f32[1,512], index: 3, kind: input, shape index: {}]
  %s4 = inlined_call_operand.hbm [shape: f32[32,512], index: 4, kind: output, shape index: {}]
  %s5 = sld [smem:[#allocation0]]
  $region65: #{tpu_custom_call.1} parent=0
    _
  %s7 = ssub.s32 1, %s5
  %s8 = scalar_select 0, %s7, %s5
  $region1: #{tpu_custom_call.1} parent=0
    #allocation3 [shape = 'u8[16384]{0}', space=vmem, size = 0x4000, scoped, tag = 'input window, operand 0']
    #allocation4 [shape = 's32[2]{0}', space=sflag, size = 0x8, scoped, tag = 'scoped memory for tpu_custom_call.1']
    #allocation5 [shape = 's32[2]{0}', space=sflag, size = 0x8, scoped, tag = 'scoped memory for tpu_custom_call.1']
    #allocation6 [shape = 'u8[131072]{0}', space=vmem, size = 0x20000, scoped, tag = 'input window, operand 1']
    #allocation7 [shape = 's32[2]{0}', space=sflag, size = 0x8, scoped, tag = 'scoped memory for tpu_custom_call.1']
    #allocation8 [shape = 'u8[65536]{0}', space=vmem, size = 0x10000, scoped, tag = 'output window, operand 0']
    %9 = vsyncpa [#allocation4], 0
    %s10 = scalar_lea.sflag [#allocation4], 1
    %11 = vsyncpa %s10, 0
    %12 = vsyncpa [#allocation7], 0
    %s13 = scalar_lea.sflag [#allocation7], 1
    %14 = vsyncpa %s13, 0
    %15 = vsyncpa [#allocation5], 0
    %s16 = scalar_lea.sflag [#allocation5], 1
    %17 = vsyncpa %s16, 0
    loop: start=0, step=1, limit=6
    $region2: #{tpu_custom_call.1} parent=1 // loop_pre_header
      _
    $region3: #{tpu_custom_call.1} parent=1 // loop_header
      %s19 = sphi 0, %s23
      %p20 = scmp.ge.s32.totalorder %s19, 6
      %s26 = sphi 0, %s45
      %s27 = sphi 0, %s41
      %s28 = sphi 0, %s37
      %s29 = sphi 0, %s26
      %s30 = sphi 0, %s27
      %s31 = sphi 0, %s28
      %s32 = sphi 0, %s29
      %s33 = sphi 0, %s30
      %s34 = sphi 0, %s31
      %s50 = sphi 0, %s52
      %s53 = sphi 0, %s50
      %s54 = sphi 0, %s53
      %s70 = sphi 0, %s54
      %s78 = sphi 0, %s80
      %s81 = sphi 0, %s78
      %s82 = sphi 0, %s81
      %s98 = sphi 0, %s82
      %s104 = sphi 0, %s106
      %s107 = sphi 0, %s104
      %s108 = sphi 0, %s107
      %s124 = sphi 0, %s108
      %s130 = sphi 0, %s132
      %s133 = sphi 0, %s130
      %s134 = sphi 0, %s133
      %s150 = sphi 0, %s134
      %s158 = sphi 0, %s160
      %s161 = sphi 0, %s158
      %s162 = sphi 0, %s161
      %s178 = sphi 0, %s162
    $region4: #{tpu_custom_call.1} parent=1 // loop_header_branch
      %22 = sbr.rel (%p20) target = $region8
    $region5: #{tpu_custom_call.1} parent=1 // loop_body
      %s24 = ssub.s32 %s19, 1
      %s25 = ssub.s32 %s19, 2
      %s35 = sadd.s32 1, %s28
      %p36 = scmp.ge.s32.totalorder %s35, 2
      %s37 = scalar_select %p36, 0, %s35
      %s38 = sadd.s32 1, %s27
      %s39 = scalar_select %p36, %s38, %s27
      %p40 = scmp.ge.s32.totalorder %s39, 2
      %s41 = scalar_select %p40, 0, %s39
      %s42 = sadd.s32 1, %s26
      %s43 = scalar_select %p40, %s42, %s26
      %p44 = scmp.ge.s32.totalorder %s43, 1
      %s45 = scalar_select %p44, 0, %s43
      %s46 = ssub.s32 %s26, %s45
      %s47 = ssub.s32 %s28, %s37
      %s48 = sor.u32 %s46, %s47
      %p49 = scmp.eq.s32.totalorder %s48, 0
      %s51 = sadd.s32 %s50, 1
      %s52 = scalar_select %p49, %s50, %s51
      %p55 = pneg %p49
      %p56 = scmp.eq.s32.totalorder %s19, 3
      %p57 = por %p55, %p56
      %p58 = scmp.ne.s32.totalorder %s50, %s53
      %p59 = scmp.eq.s32.totalorder %s19, 0
      %p60 = por %p58, %p59
      %p61 = scmp.ne.s32.totalorder %s50, %s53
      %p62 = scmp.eq.s32.totalorder %s24, 3
      %p63 = por %p61, %p62
      %p64 = scmp.ne.s32.totalorder %s53, %s54
      %p65 = scmp.eq.s32.totalorder %s24, 0
      %p66 = por %p64, %p65
      %p67 = scmp.ne.s32.totalorder %s53, %s54
      %p68 = scmp.eq.s32.totalorder %s25, 3
      %p69 = por %p67, %p68
      %p71 = scmp.ne.s32.totalorder %s54, %s70
      %p72 = scmp.eq.s32.totalorder %s25, 0
      %p73 = por %p71, %p72
      %s74 = ssub.s32 %s28, %s37
      %s75 = ssub.s32 %s27, %s41
      %s76 = sor.u32 %s74, %s75
      %p77 = scmp.eq.s32.totalorder %s76, 0
      %s79 = sadd.s32 %s78, 1
      %s80 = scalar_select %p77, %s78, %s79
      %p83 = pneg %p77
      %p84 = scmp.eq.s32.totalorder %s19, 3
      %p85 = por %p83, %p84
      %p86 = scmp.ne.s32.totalorder %s78, %s81
      %p87 = scmp.eq.s32.totalorder %s19, 0
      %p88 = por %p86, %p87
      %p89 = scmp.ne.s32.totalorder %s78, %s81
      %p90 = scmp.eq.s32.totalorder %s24, 3
      %p91 = por %p89, %p90
      %p92 = scmp.ne.s32.totalorder %s81, %s82
      %p93 = scmp.eq.s32.totalorder %s24, 0
      %p94 = por %p92, %p93
      %p95 = scmp.ne.s32.totalorder %s81, %s82
      %p96 = scmp.eq.s32.totalorder %s25, 3
      %p97 = por %p95, %p96
      %p99 = scmp.ne.s32.totalorder %s82, %s98
      %p100 = scmp.eq.s32.totalorder %s25, 0
      %p101 = por %p99, %p100
      %s102 = ssub.s32 %s27, %s41
      %p103 = scmp.eq.s32.totalorder %s102, 0
      %s105 = sadd.s32 %s104, 1
      %s106 = scalar_select %p103, %s104, %s105
      %p109 = pneg %p103
      %p110 = scmp.eq.s32.totalorder %s19, 3
      %p111 = por %p109, %p110
      %p112 = scmp.ne.s32.totalorder %s104, %s107
      %p113 = scmp.eq.s32.totalorder %s19, 0
      %p114 = por %p112, %p113
      %p115 = scmp.ne.s32.totalorder %s104, %s107
      %p116 = scmp.eq.s32.totalorder %s24, 3
      %p117 = por %p115, %p116
      %p118 = scmp.ne.s32.totalorder %s107, %s108
      %p119 = scmp.eq.s32.totalorder %s24, 0
      %p120 = por %p118, %p119
      %p121 = scmp.ne.s32.totalorder %s107, %s108
      %p122 = scmp.eq.s32.totalorder %s25, 3
      %p123 = por %p121, %p122
      %p125 = scmp.ne.s32.totalorder %s108, %s124
      %p126 = scmp.eq.s32.totalorder %s25, 0
      %p127 = por %p125, %p126
      %s128 = ssub.s32 %s27, %s41
      %p129 = scmp.eq.s32.totalorder %s128, 0
      %s131 = sadd.s32 %s130, 1
      %s132 = scalar_select %p129, %s130, %s131
      %p135 = pneg %p129
      %p136 = scmp.eq.s32.totalorder %s19, 3
      %p137 = por %p135, %p136
      %p138 = scmp.ne.s32.totalorder %s130, %s133
      %p139 = scmp.eq.s32.totalorder %s19, 0
      %p140 = por %p138, %p139
      %p141 = scmp.ne.s32.totalorder %s130, %s133
      %p142 = scmp.eq.s32.totalorder %s24, 3
      %p143 = por %p141, %p142
      %p144 = scmp.ne.s32.totalorder %s133, %s134
      %p145 = scmp.eq.s32.totalorder %s24, 0
      %p146 = por %p144, %p145
      %p147 = scmp.ne.s32.totalorder %s133, %s134
      %p148 = scmp.eq.s32.totalorder %s25, 3
      %p149 = por %p147, %p148
      %p151 = scmp.ne.s32.totalorder %s134, %s150
      %p152 = scmp.eq.s32.totalorder %s25, 0
      %p153 = por %p151, %p152
      %s154 = ssub.s32 %s26, %s45
      %s155 = ssub.s32 %s27, %s41
      %s156 = sor.u32 %s154, %s155
      %p157 = scmp.eq.s32.totalorder %s156, 0
      %s159 = sadd.s32 %s158, 1
      %s160 = scalar_select %p157, %s158, %s159
      %p163 = pneg %p157
      %p164 = scmp.eq.s32.totalorder %s19, 3
      %p165 = por %p163, %p164
      %p166 = scmp.ne.s32.totalorder %s158, %s161
      %p167 = scmp.eq.s32.totalorder %s19, 0
      %p168 = por %p166, %p167
      %p169 = scmp.ne.s32.totalorder %s158, %s161
      %p170 = scmp.eq.s32.totalorder %s24, 3
      %p171 = por %p169, %p170
      %p172 = scmp.ne.s32.totalorder %s161, %s162
      %p173 = scmp.eq.s32.totalorder %s24, 0
      %p174 = por %p172, %p173
      %p175 = scmp.ne.s32.totalorder %s161, %s162
      %p176 = scmp.eq.s32.totalorder %s25, 3
      %p177 = por %p175, %p176
      %p179 = scmp.ne.s32.totalorder %s162, %s178
      %p180 = scmp.eq.s32.totalorder %s25, 0
      %p181 = por %p179, %p180
      %p182 = scmp.le.s32.totalorder 1, %s19
      %p183 = scmp.lt.s32.totalorder %s19, 5
      %p184 = pnand %p182, %p183
      %p185 = pneg %p184
      // Predicated region
      $region9: #{tpu_custom_call.1} parent=5 // pred_check
        _
      $region10: #{tpu_custom_call.1} parent=5 // pred_check_branch
        %187 = sbr.rel (%p184) target = $region12
      $region11: #{tpu_custom_call.1} parent=5 // pred_region
        %s188 = ssub.s32 %s19, 1
      $region12: #{tpu_custom_call.1} parent=5 // pred_fallthru
        _
      %p189 = scmp.lt.s32.totalorder %s19, 4
      // Predicated region
      $region13: #{tpu_custom_call.1} parent=5 // pred_check
        %p190 = pneg %p189
      $region14: #{tpu_custom_call.1} parent=5 // pred_check_branch
        %192 = sbr.rel (%p190) target = $region16
      $region15: #{tpu_custom_call.1} parent=5 // pred_region
        // Predicated region
        $region17: #{tpu_custom_call.1} parent=15 // pred_check
          %p193 = pneg %p60
        $region18: #{tpu_custom_call.1} parent=15 // pred_check_branch
          %195 = sbr.rel (%p193) target = $region20
        $region19: #{tpu_custom_call.1} parent=15 // pred_region
          %s196 = sand.u32 %s50, 1
          %s197 = scalar_lea.sflag [#allocation4], %s196
          %s198 = sand.u32 %s50, 1
          %s199 = smul.addr %s198, 16
          %s200 = scalar_lea.vmem [#allocation3], %s199
          %s201 = smul.u32 4, %s26
          %s203 = ssub.s32 256, 256
          %204 = vsyncadd %s197, %s203
          %s205 = smul.addr %s201, 2
          %s206 = sadd.s32 %s28, %s205
          %s207 = smul.addr %s206, 64
          %s208 = scalar_lea.hbm %s0, %s207
          %s209 = sshll.u32 %s200, 4
          %s210 = int_to_ptr.vmem [resolvable:$true] %s209
          %215 = dma.hbm_to_vmem [thread:$0]  %s208, 256, %s210, %s197, 128, 64, 4
        $region20: #{tpu_custom_call.1} parent=15 // pred_fallthru
          _
        // Predicated region
        $region21: #{tpu_custom_call.1} parent=15 // pred_check
          %p216 = pneg %p88
        $region22: #{tpu_custom_call.1} parent=15 // pred_check_branch
          %218 = sbr.rel (%p216) target = $region24
        $region23: #{tpu_custom_call.1} parent=15 // pred_region
          %s219 = sand.u32 %s78, 1
          %s220 = scalar_lea.sflag [#allocation7], %s219
          %s221 = sand.u32 %s78, 1
          %s222 = smul.addr %s221, 128
          %s223 = scalar_lea.vmem [#allocation6], %s222
          %s224 = smul.u32 16, %s28
          %s225 = smul.u32 2, %s27
          %s227 = ssub.s32 2048, 2048
          %228 = vsyncadd %s220, %s227
          %s229 = smul.addr %s224, 4
          %s230 = sadd.s32 %s225, %s229
          %s231 = smul.addr %s230, 64
          %s232 = scalar_lea.hbm %s1, %s231
          %s233 = sshll.u32 %s223, 4
          %s234 = int_to_ptr.vmem [resolvable:$true] %s233
          %239 = dma.hbm_to_vmem [thread:$0]  %s232, 2048, %s234, %s220, 256, 128, 8
        $region24: #{tpu_custom_call.1} parent=15 // pred_fallthru
          _
        // Predicated region
        $region25: #{tpu_custom_call.1} parent=15 // pred_check
          %p240 = pneg %p114
        $region26: #{tpu_custom_call.1} parent=15 // pred_check_branch
          %242 = sbr.rel (%p240) target = $region28
        $region27: #{tpu_custom_call.1} parent=15 // pred_region
          %s243 = smul.u32 2, %s27
          %p244 = scmp.lt.s32.totalorder %s243, 3
          %s245 = scalar_select %p244, %s243, 3
          %s246 = scalar_lea.vmem %s2, %s245
          %s247 = smul.u32 2, %s27
        $region28: #{tpu_custom_call.1} parent=15 // pred_fallthru
          _
        // Predicated region
        $region29: #{tpu_custom_call.1} parent=15 // pred_check
          %p248 = pneg %p140
        $region30: #{tpu_custom_call.1} parent=15 // pred_check_branch
          %250 = sbr.rel (%p248) target = $region32
        $region31: #{tpu_custom_call.1} parent=15 // pred_region
          %s251 = smul.u32 2, %s27
          %p252 = scmp.lt.s32.totalorder %s251, 3
          %s253 = scalar_select %p252, %s251, 3
          %s254 = scalar_lea.vmem %s3, %s253
          %s255 = smul.u32 2, %s27
        $region32: #{tpu_custom_call.1} parent=15 // pred_fallthru
          _
      $region16: #{tpu_custom_call.1} parent=5 // pred_fallthru
        _
      %p256 = scmp.le.s32.totalorder 1, %s19
      %p257 = scmp.lt.s32.totalorder %s19, 5
      %p258 = pnand %p256, %p257
      %p259 = pneg %p258
      // Predicated region
      $region33: #{tpu_custom_call.1} parent=5 // pred_check
        _
      $region34: #{tpu_custom_call.1} parent=5 // pred_check_branch
        %261 = sbr.rel (%p258) target = $region36
      $region35: #{tpu_custom_call.1} parent=5 // pred_region
        %s262 = ssub.s32 %s19, 1
        %s263 = sand.u32 %s53, 1
        %s264 = scalar_lea.sflag [#allocation4], %s263
        %s265 = sand.u32 %s53, 1
        %s266 = smul.addr %s265, 16
        %s267 = scalar_lea.vmem [#allocation3], %s266
        // Predicated region
        $region37: #{tpu_custom_call.1} parent=35 // pred_check
          %p268 = pneg %p66
        $region38: #{tpu_custom_call.1} parent=35 // pred_check_branch
          %270 = sbr.rel (%p268) target = $region40
        $region39: #{tpu_custom_call.1} parent=35 // pred_region
          %271 = dma.done %s264, 256
        $region40: #{tpu_custom_call.1} parent=35 // pred_fallthru
          _
        %s272 = sand.u32 %s81, 1
        %s273 = scalar_lea.sflag [#allocation7], %s272
        %s274 = sand.u32 %s81, 1
        %s275 = smul.addr %s274, 128
        %s276 = scalar_lea.vmem [#allocation6], %s275
        // Predicated region
        $region41: #{tpu_custom_call.1} parent=35 // pred_check
          %p277 = pneg %p94
        $region42: #{tpu_custom_call.1} parent=35 // pred_check_branch
          %279 = sbr.rel (%p277) target = $region44
        $region43: #{tpu_custom_call.1} parent=35 // pred_region
          %280 = dma.done %s273, 2048
        $region44: #{tpu_custom_call.1} parent=35 // pred_fallthru
          _
        %s281 = sand.u32 %s53, 1
        %s282 = scalar_lea.sflag [#allocation4], %s281
        %s283 = sand.u32 %s53, 1
        %s284 = smul.addr %s283, 16
        %s285 = scalar_lea.vmem [#allocation3], %s284
        %p286 = pneg %p66
        %p287 = pneg %p63
        %s288 = sand.u32 %s81, 1
        %s289 = scalar_lea.sflag [#allocation7], %s288
        %s290 = sand.u32 %s81, 1
        %s291 = smul.addr %s290, 128
        %s292 = scalar_lea.vmem [#allocation6], %s291
        %p293 = pneg %p94
        %p294 = pneg %p91
        %s295 = smul.u32 2, %s30
        %p296 = scmp.lt.s32.totalorder %s295, 3
        %s297 = scalar_select %p296, %s295, 3
        %s298 = scalar_lea.vmem %s2, %s297
        %p299 = pneg %p120
        %p300 = pneg %p117
        %s301 = smul.u32 2, %s30
        %p302 = scmp.lt.s32.totalorder %s301, 3
        %s303 = scalar_select %p302, %s301, 3
        %s304 = scalar_lea.vmem %s3, %s303
        %p305 = pneg %p146
        %p306 = pneg %p143
        %p307 = pneg %p174
        %p308 = pneg %p171
        %s309 = sand.u32 %s161, 1
        %s310 = scalar_lea.sflag [#allocation5], %s309
        %s311 = sand.u32 %s161, 1
        %s312 = smul.addr %s311, 64
        %s313 = scalar_lea.vmem [#allocation8], %s312
        %s314 = smul.u32 4, %s29
        %s315 = smul.u32 16, %s31
        %s316 = smul.u32 2, %s30
        %s317 = smul.u32 2, %s30
        %p318 = scmp.lt.s32.totalorder %s317, 3
        %s319 = scalar_select %p318, %s317, 3
        %s320 = scalar_lea.vmem %s2, %s319
        %s321 = smul.u32 2, %s30
        %s322 = smul.u32 2, %s30
        %p323 = scmp.lt.s32.totalorder %s322, 3
        %s324 = scalar_select %p323, %s322, 3
        %s325 = scalar_lea.vmem %s3, %s324
        %s326 = smul.u32 2, %s30
        %s327 = smul.u32 4, %s29
        %s328 = smul.u32 2, %s30
        %p330 = scmp.eq.s32.totalorder %s31, 0
        // Predicated region
        $region45: #{tpu_custom_call.1} parent=35 // pred_check
          %p331 = pneg %p330
        $region46: #{tpu_custom_call.1} parent=35 // pred_check_branch
          %333 = sbr.rel (%p331) target = $region48
        $region47: #{tpu_custom_call.1} parent=35 // pred_region
          %334 = vst [vmem:[#allocation2] sm:$0xff] 0.0
          %335 = vst [vmem:[#allocation2 + $0x8] sm:$0xff] 0.0
          %336 = vst [vmem:[#allocation2 + $0x10] sm:$0xff] 0.0
          %337 = vst [vmem:[#allocation2 + $0x18] sm:$0xff] 0.0
          %338 = vst [vmem:[#allocation2 + $0x20] sm:$0xff] 0.0
          %339 = vst [vmem:[#allocation2 + $0x28] sm:$0xff] 0.0
          %340 = vst [vmem:[#allocation2 + $0x30] sm:$0xff] 0.0
          %341 = vst [vmem:[#allocation2 + $0x38] sm:$0xff] 0.0
        $region48: #{tpu_custom_call.1} parent=35 // pred_fallthru
          _
        %v342 = vld [vmem:[#allocation2] sm:$0xff]
        %v343 = vld [vmem:[#allocation2 + $0x8] sm:$0xff]
        %v344 = vld [vmem:[#allocation2 + $0x10] sm:$0xff]
        %v345 = vld [vmem:[#allocation2 + $0x18] sm:$0xff]
        %v346 = vld [vmem:[#allocation2 + $0x20] sm:$0xff]
        %v347 = vld [vmem:[#allocation2 + $0x28] sm:$0xff]
        %v348 = vld [vmem:[#allocation2 + $0x30] sm:$0xff]
        %v349 = vld [vmem:[#allocation2 + $0x38] sm:$0xff]
        %v350 = vld [vmem:[%s267] sm:$0xf]
        %v351 = vld [vmem:[%s267 + $0x4] sm:$0xf]
        %v352 = vld [vmem:[%s267 + $0x8] sm:$0xf]
        %v353 = vld [vmem:[%s267 + $0xc] sm:$0xf]
        %v354 = vld [vmem:[%s276] sm:$0xff]
        %v355 = vld [vmem:[%s276 + $0x8] sm:$0xff]
        %v356 = vld [vmem:[%s276 + $0x10] sm:$0xff]
        %v357 = vld [vmem:[%s276 + $0x18] sm:$0xff]
        %v358 = vld [vmem:[%s276 + $0x20] sm:$0xff]
        %v359 = vld [vmem:[%s276 + $0x28] sm:$0xff]
        %v360 = vld [vmem:[%s276 + $0x30] sm:$0xff]
        %v361 = vld [vmem:[%s276 + $0x38] sm:$0xff]
        %v362 = vld [vmem:[%s276 + $0x40] sm:$0xff]
        %v363 = vld [vmem:[%s276 + $0x48] sm:$0xff]
        %v364 = vld [vmem:[%s276 + $0x50] sm:$0xff]
        %v365 = vld [vmem:[%s276 + $0x58] sm:$0xff]
        %v366 = vld [vmem:[%s276 + $0x60] sm:$0xff]
        %v367 = vld [vmem:[%s276 + $0x68] sm:$0xff]
        %v368 = vld [vmem:[%s276 + $0x70] sm:$0xff]
        %v369 = vld [vmem:[%s276 + $0x78] sm:$0xff]
        %v374 = vunpack.c.l.b16 %v350
        %v375 = vunpack.c.l.b16 %v351
        %v376 = vunpack.c.l.b16 %v352
        %v377 = vunpack.c.l.b16 %v353
        %v378 = vpack.c.b16 %v375, %v374
        %v379 = vpack.c.b16 %v377, %v376
        %v398 = vunpack.c.l.b16 %v354
        %v399 = vunpack.c.h.b16 %v354
        %v400 = vunpack.c.l.b16 %v355
        %v401 = vunpack.c.h.b16 %v355
        %v402 = vunpack.c.l.b16 %v356
        %v403 = vunpack.c.h.b16 %v356
        %v404 = vunpack.c.l.b16 %v357
        %v405 = vunpack.c.h.b16 %v357
        %v406 = vunpack.c.l.b16 %v358
        %v407 = vunpack.c.h.b16 %v358
        %v408 = vunpack.c.l.b16 %v359
        %v409 = vunpack.c.h.b16 %v359
        %v410 = vunpack.c.l.b16 %v360
        %v411 = vunpack.c.h.b16 %v360
        %v412 = vunpack.c.l.b16 %v361
        %v413 = vunpack.c.h.b16 %v361
        %v414 = vunpack.c.l.b16 %v362
        %v415 = vunpack.c.h.b16 %v362
        %v416 = vunpack.c.l.b16 %v363
        %v417 = vunpack.c.h.b16 %v363
        %v418 = vunpack.c.l.b16 %v364
        %v419 = vunpack.c.h.b16 %v364
        %v420 = vunpack.c.l.b16 %v365
        %v421 = vunpack.c.h.b16 %v365
        %v422 = vunpack.c.l.b16 %v366
        %v423 = vunpack.c.h.b16 %v366
        %v424 = vunpack.c.l.b16 %v367
        %v425 = vunpack.c.h.b16 %v367
        %v426 = vunpack.c.l.b16 %v368
        %v427 = vunpack.c.h.b16 %v368
        %v428 = vunpack.c.l.b16 %v369
        %v429 = vunpack.c.h.b16 %v369
        %v430 = vpack.c.b16 %v400, %v398
        %v431 = vpack.c.b16 %v401, %v399
        %v432 = vpack.c.b16 %v404, %v402
        %v433 = vpack.c.b16 %v405, %v403
        %v434 = vpack.c.b16 %v408, %v406
        %v435 = vpack.c.b16 %v409, %v407
        %v436 = vpack.c.b16 %v412, %v410
        %v437 = vpack.c.b16 %v413, %v411
        %v438 = vpack.c.b16 %v416, %v414
        %v439 = vpack.c.b16 %v417, %v415
        %v440 = vpack.c.b16 %v420, %v418
        %v441 = vpack.c.b16 %v421, %v419
        %v442 = vpack.c.b16 %v424, %v422
        %v443 = vpack.c.b16 %v425, %v423
        %v444 = vpack.c.b16 %v428, %v426
        %v445 = vpack.c.b16 %v429, %v427
        %462 = vmatprep.subr.bf16.mxu0 %v431
        %463 = vmatpush1.bf16.msra.mxu0 %v430
        %464 = vmatprep.subr.bf16.mxu0 %v433
        %465 = vmatpush1.bf16.msra.mxu0 %v432
        %466 = vmatprep.subr.bf16.mxu0 %v435
        %467 = vmatpush1.bf16.msra.mxu0 %v434
        %468 = vmatprep.subr.bf16.mxu0 %v437
        %469 = vmatpush1.bf16.msra.mxu0 %v436
        %470 = vmatprep.subr.bf16.mxu0 %v439
        %471 = vmatpush1.bf16.msra.mxu0 %v438
        %472 = vmatprep.subr.bf16.mxu0 %v441
        %473 = vmatpush1.bf16.msra.mxu0 %v440
        %474 = vmatprep.subr.bf16.mxu0 %v443
        %475 = vmatpush1.bf16.msra.mxu0 %v442
        %476 = vmatprep.subr.bf16.mxu0 %v445
        %477 = vmatpush1.bf16.msra.mxu0 %v444
        %478 = vmatprep.subr.bf16.mxu0 0
        %479 = vmatpush1.bf16.msra.mxu0 0
        %480 = vmatprep.subr.bf16.mxu0 0
        %481 = vmatpush1.bf16.msra.mxu0 0
        %482 = vmatprep.subr.bf16.mxu0 0
        %483 = vmatpush1.bf16.msra.mxu0 0
        %484 = vmatprep.subr.bf16.mxu0 0
        %485 = vmatpush1.bf16.msra.mxu0 0
        %486 = vmatprep.subr.bf16.mxu0 0
        %487 = vmatpush1.bf16.msra.mxu0 0
        %488 = vmatprep.subr.bf16.mxu0 0
        %489 = vmatpush1.bf16.msra.mxu0 0
        %490 = vmatprep.subr.bf16.mxu0 0
        %491 = vmatpush1.bf16.msra.mxu0 0
        %492 = vmatprep.subr.bf16.mxu0 0
        %493 = vmatpush1.bf16.msra.mxu0 0
        %494 = vmatprep.mubr.bf16.mxu0 0
        %495 = vmatmul.mubr.bf16.gmra.mrb[0].mxu0 %v378
        %v496 = vpop.f32.mrb[0].mxu0
        %v497 = vadd.f32 0.0, %v496
        %v498 = vpop.f32.mrb[0].mxu0
        %v499 = vadd.f32 0.0, %v498
        %v500 = vpop.f32.mrb[0].mxu0
        %v501 = vadd.f32 0.0, %v500
        %v502 = vpop.f32.mrb[0].mxu0
        %v503 = vadd.f32 0.0, %v502
        %504 = vmatprep.mubr.bf16.mxu0 0
        %505 = vmatmul.mubr.bf16.gmra.mrb[0].mxu0 %v379
        %v506 = vpop.f32.mrb[0].mxu0
        %v507 = vadd.f32 0.0, %v506
        %v508 = vpop.f32.mrb[0].mxu0
        %v509 = vadd.f32 0.0, %v508
        %v510 = vpop.f32.mrb[0].mxu0
        %v511 = vadd.f32 0.0, %v510
        %v512 = vpop.f32.mrb[0].mxu0
        %v513 = vadd.f32 0.0, %v512
        %514 = vdwg.mxu0
        %v515 = vadd.f32 %v342, %v497
        %v516 = vadd.f32 %v343, %v499
        %v517 = vadd.f32 %v344, %v501
        %v518 = vadd.f32 %v345, %v503
        %v519 = vadd.f32 %v346, %v507
        %v520 = vadd.f32 %v347, %v509
        %v521 = vadd.f32 %v348, %v511
        %v522 = vadd.f32 %v349, %v513
        %523 = vst [vmem:[#allocation2] sm:$0xff] %v515
        %524 = vst [vmem:[#allocation2 + $0x8] sm:$0xff] %v516
        %525 = vst [vmem:[#allocation2 + $0x10] sm:$0xff] %v517
        %526 = vst [vmem:[#allocation2 + $0x18] sm:$0xff] %v518
        %527 = vst [vmem:[#allocation2 + $0x20] sm:$0xff] %v519
        %528 = vst [vmem:[#allocation2 + $0x28] sm:$0xff] %v520
        %529 = vst [vmem:[#allocation2 + $0x30] sm:$0xff] %v521
        %530 = vst [vmem:[#allocation2 + $0x38] sm:$0xff] %v522
        %p531 = scmp.eq.s32.totalorder %s31, 1
        // Predicated region
        $region49: #{tpu_custom_call.1} parent=35 // pred_check
          %p532 = pneg %p531
        $region50: #{tpu_custom_call.1} parent=35 // pred_check_branch
          %534 = sbr.rel (%p532) target = $region52
        $region51: #{tpu_custom_call.1} parent=35 // pred_region
          %v535 = vld [vmem:[#allocation2] sm:$0xff]
          %v536 = vld [vmem:[#allocation2 + $0x8] sm:$0xff]
          %v537 = vld [vmem:[#allocation2 + $0x10] sm:$0xff]
          %v538 = vld [vmem:[#allocation2 + $0x18] sm:$0xff]
          %v539 = vld [vmem:[#allocation2 + $0x20] sm:$0xff]
          %v540 = vld [vmem:[#allocation2 + $0x28] sm:$0xff]
          %v541 = vld [vmem:[#allocation2 + $0x30] sm:$0xff]
          %v542 = vld [vmem:[#allocation2 + $0x38] sm:$0xff]
          %v543 = vld [vmem:[%s320] sm:$0x3]
          %v545 = vlaneseq
          %v546 = vshrl.u32 %v545, 7
          %v547 = vsub.s32 0, %v546
          %v548 = vrot.slane %v543, %v547
          %v549 = vlaneseq
          %v550 = vshrl.u32 %v549, 7
          %v551 = vsub.s32 1, %v550
          %v552 = vrot.slane %v543, %v551
          %v555 = vmul.f32 %v535, %v548
          %v556 = vmul.f32 %v536, %v552
          %v557 = vmul.f32 %v537, %v548
          %v558 = vmul.f32 %v538, %v552
          %v559 = vmul.f32 %v539, %v548
          %v560 = vmul.f32 %v540, %v552
          %v561 = vmul.f32 %v541, %v548
          %v562 = vmul.f32 %v542, %v552
          %v563 = vld [vmem:[%s325] sm:$0x3]
          %v565 = vlaneseq
          %v566 = vshrl.u32 %v565, 7
          %v567 = vsub.s32 0, %v566
          %v568 = vrot.slane %v563, %v567
          %v569 = vlaneseq
          %v570 = vshrl.u32 %v569, 7
          %v571 = vsub.s32 1, %v570
          %v572 = vrot.slane %v563, %v571
          %v575 = vadd.f32 %v555, %v568
          %v576 = vadd.f32 %v556, %v572
          %v577 = vadd.f32 %v557, %v568
          %v578 = vadd.f32 %v558, %v572
          %v579 = vadd.f32 %v559, %v568
          %v580 = vadd.f32 %v560, %v572
          %v581 = vadd.f32 %v561, %v568
          %v582 = vadd.f32 %v562, %v572
          %v583 = vmax.f32 %v575, 0.0
          %v584 = vmax.f32 %v576, 0.0
          %v585 = vmax.f32 %v577, 0.0
          %v586 = vmax.f32 %v578, 0.0
          %v587 = vmax.f32 %v579, 0.0
          %v588 = vmax.f32 %v580, 0.0
          %v589 = vmax.f32 %v581, 0.0
          %v590 = vmax.f32 %v582, 0.0
          %591 = vst [vmem:[%s313] sm:$0xff] %v583
          %592 = vst [vmem:[%s313 + $0x8] sm:$0xff] %v584
          %593 = vst [vmem:[%s313 + $0x10] sm:$0xff] %v585
          %594 = vst [vmem:[%s313 + $0x18] sm:$0xff] %v586
          %595 = vst [vmem:[%s313 + $0x20] sm:$0xff] %v587
          %596 = vst [vmem:[%s313 + $0x28] sm:$0xff] %v588
          %597 = vst [vmem:[%s313 + $0x30] sm:$0xff] %v589
          %598 = vst [vmem:[%s313 + $0x38] sm:$0xff] %v590
        $region52: #{tpu_custom_call.1} parent=35 // pred_fallthru
          _
        %s599 = sand.u32 %s161, 1
        %s600 = scalar_lea.sflag [#allocation5], %s599
        %s601 = sand.u32 %s161, 1
        %s602 = smul.addr %s601, 64
        %s603 = scalar_lea.vmem [#allocation8], %s602
        // Predicated region
        $region53: #{tpu_custom_call.1} parent=35 // pred_check
          %p604 = pneg %p171
        $region54: #{tpu_custom_call.1} parent=35 // pred_check_branch
          %606 = sbr.rel (%p604) target = $region56
        $region55: #{tpu_custom_call.1} parent=35 // pred_region
          %s607 = smul.u32 4, %s29
          %s608 = smul.u32 2, %s30
          %s610 = ssub.s32 1024, 1024
          %611 = vsyncadd %s600, %s610
          %s612 = smul.addr %s607, 4
          %s613 = sadd.s32 %s608, %s612
          %s614 = smul.addr %s613, 128
          %s615 = scalar_lea.hbm %s4, %s614
          %s616 = sshll.u32 %s603, 4
          %s617 = int_to_ptr.vmem [resolvable:$true] %s616
          %622 = dma.vmem_to_hbm [thread:$0]  %s617, 1024, %s615, %s600, 256, 512, 16
        $region56: #{tpu_custom_call.1} parent=35 // pred_fallthru
          _
      $region36: #{tpu_custom_call.1} parent=5 // pred_fallthru
        _
      %p623 = scmp.le.s32.totalorder 2, %s19
      // Predicated region
      $region57: #{tpu_custom_call.1} parent=5 // pred_check
        %p624 = pneg %p623
      $region58: #{tpu_custom_call.1} parent=5 // pred_check_branch
        %626 = sbr.rel (%p624) target = $region60
      $region59: #{tpu_custom_call.1} parent=5 // pred_region
        %s627 = ssub.s32 %s19, 2
        // Predicated region
        $region61: #{tpu_custom_call.1} parent=59 // pred_check
          %p628 = pneg %p177
        $region62: #{tpu_custom_call.1} parent=59 // pred_check_branch
          %630 = sbr.rel (%p628) target = $region64
        $region63: #{tpu_custom_call.1} parent=59 // pred_region
          %s631 = sand.u32 %s162, 1
          %s632 = scalar_lea.sflag [#allocation5], %s631
          %s633 = sand.u32 %s162, 1
          %s634 = smul.addr %s633, 64
          %s635 = scalar_lea.vmem [#allocation8], %s634
          %636 = dma.done %s632, 1024
        $region64: #{tpu_custom_call.1} parent=59 // pred_fallthru
          _
      $region60: #{tpu_custom_call.1} parent=5 // pred_fallthru
        _
    $region6: #{tpu_custom_call.1} parent=1 // loop_footer
      %s23 = sadd.s32 1, %s19
    $region7: #{tpu_custom_call.1} parent=1 // loop_footer_branch
      %18 = sbr.rel target = $region3
    $region8: #{tpu_custom_call.1} parent=1 // loop_exit
      _
    %637 = vsyncpa [#allocation4], 1
    %s638 = scalar_lea.sflag [#allocation4], 1
    %639 = vsyncpa %s638, 1
    %640 = vsyncpa [#allocation7], 1
    %s641 = scalar_lea.sflag [#allocation7], 1
    %642 = vsyncpa %s641, 1
    %643 = vsyncpa [#allocation5], 1
    %s644 = scalar_lea.sflag [#allocation5], 1
    %645 = vsyncpa %s644, 1

</llo_original>
